<compile_context>
chip_gen: v7x
topology: tpu7x:2x2x1
jax: 0.10.0
libtpu: 0.0.40
codegen_flags: <defaults>
</compile_context>

<pallas_src>
import functools

import jax
import jax.numpy as jnp
from jax import lax
from jax.experimental import pallas as pl
from jax.experimental.pallas import tpu as pltpu

LANE = 128
SUBLANE = 8


def _pow_gamma(x, gamma):
    """x ** gamma with a repeated-multiply fast path for small integer gamma."""
    if float(gamma).is_integer():
        g = int(gamma)
        if g == 0:
            return jnp.ones_like(x)
        if 0 < g <= 8:
            acc = x
            for _ in range(g - 1):
                acc = acc * x
            return acc
    return x ** gamma


def _focal_kernel(p_ref, t_ref, out_ref, *, gamma, alpha, eps, n_valid, tm):
    i = pl.program_id(0)

    p = p_ref[...].astype(jnp.float32)
    t = t_ref[...].astype(jnp.float32)

    pc = jnp.clip(p, eps, 1.0 - eps)          # clamp(predict, eps, 1-eps)
    is1 = t == 1.0
    is0 = t == 0.0

    # Fused focal-loss term: per element exactly one of
    #   alpha*(1-pt_1)^g*log(pt_1)  /  (1-alpha)*pt_0^g*log(1-pt_0)
    # is non-trivial; the other is O(eps^g * eps) ~ 1e-21 and is dropped.
    q = jnp.where(is1, pc, 1.0 - pc)          # single log argument
    w1 = alpha * _pow_gamma(1.0 - pc, gamma)
    w0 = (1.0 - alpha) * _pow_gamma(pc, gamma)
    w = jnp.where(is1, w1, jnp.where(is0, w0, 0.0))

    # Mask out lane padding and any out-of-bounds rows of a ragged last block.
    # NOTE: flat index in int32 -> valid for tensors up to ~2.1e9 elements.
    row = lax.broadcasted_iota(jnp.int32, (tm, LANE), 0)
    lane = lax.broadcasted_iota(jnp.int32, (tm, LANE), 1)
    flat_idx = (i * tm + row) * LANE + lane
    contrib = jnp.where(flat_idx < n_valid, w * jnp.log(q), 0.0)

    # Per-block partial sum: reduce sublane groups with pure VPU adds
    # (no per-step cross-lane XLU reduce); final reduce happens outside.
    out_ref[0] = jnp.sum(contrib.reshape(tm // SUBLANE, SUBLANE, LANE), axis=0)


def _sublane_align(dtype):
    """Required sublane multiple for a dtype (8 f32 / 16 bf16 / 32 int8)."""
    itemsize = jnp.dtype(dtype).itemsize
    return SUBLANE * max(1, 4 // itemsize)


def focal_loss(predict, target, gamma=2, alpha=0.25, eps=1e-07, row_tile=2048):
    """Pallas implementation of FocalLoss.forward; returns a scalar float32."""
    if predict.dtype == jnp.bool_:
        predict = predict.astype(jnp.float32)
    if target.dtype == jnp.bool_:
        target = target.astype(jnp.int8)

    pf = predict.reshape(-1)
    tf = target.reshape(-1)
    n = pf.shape[0]
    if n == 0:
        return jnp.float32(0.0)

    # Lane/sublane alignment: pad only up to the next aligned chunk (tiny),
    # never up to a full tile.  For typical conv feature maps pad == 0 and
    # the reshape below is a pure bitcast (no extra HBM pass).
    align = max(_sublane_align(pf.dtype), _sublane_align(tf.dtype))
    chunk = align * LANE
    n_pad = ((n + chunk - 1) // chunk) * chunk
    if n_pad != n:
        pf = jnp.pad(pf, (0, n_pad - n))
        tf = jnp.pad(tf, (0, n_pad - n))
    m = n_pad // LANE                       # multiple of `align`

    rt = max(align, (int(row_tile) // align) * align)
    tm = min(rt, m)                         # multiple of `align` (>= 8)
    num_blocks = pl.cdiv(m, tm)             # ragged last block masked in-kernel

    P = pf.reshape(m, LANE)
    T = tf.reshape(m, LANE)

    kernel = functools.partial(
        _focal_kernel,
        gamma=gamma,
        alpha=float(alpha),
        eps=float(eps),                     # Python float -> jaxpr literal (fixes capture error)
        n_valid=int(n),
        tm=int(tm),
    )

    partials = pl.pallas_call(
        kernel,
        out_shape=jax.ShapeDtypeStruct((num_blocks, SUBLANE, LANE), jnp.float32),
        grid_spec=pltpu.PrefetchScalarGridSpec(
            num_scalar_prefetch=0,
            grid=(num_blocks,),
            in_specs=[
                pl.BlockSpec((tm, LANE), lambda i: (i, 0)),
                pl.BlockSpec((tm, LANE), lambda i: (i, 0)),
            ],
            out_specs=pl.BlockSpec((1, SUBLANE, LANE), lambda i: (i, 0, 0)),
        ),
        compiler_params=pltpu.CompilerParams(
            # Independent per-block partials -> both TensorCores on v7x.
            dimension_semantics=("parallel",),
        ),
    )(P, T)

    # Tiny epilogue reduction over (num_blocks, 8, 128) partial sums.
    return -jnp.sum(partials)


def focal_loss_ref(predict, target, gamma=2, alpha=0.25, eps=1e-07):
    """Pure-JAX reference mirroring the PyTorch forward exactly."""
    p = predict.astype(jnp.float32)
    t = target.astype(jnp.float32)
    pt_1 = jnp.where(t == 1.0, p, jnp.ones_like(p))
    pt_0 = jnp.where(t == 0.0, p, jnp.zeros_like(p))
    pt_1 = jnp.clip(pt_1, eps, 1.0 - eps)
    pt_0 = jnp.clip(pt_0, eps, 1.0 - eps)
    s1 = jnp.sum(alpha * (1.0 - pt_1) ** gamma * jnp.log(pt_1))
    s0 = jnp.sum((1.0 - alpha) * pt_0 ** gamma * jnp.log(1.0 - pt_0))
    return -(s1 + s0)


if __name__ == "__main__":
    key = jax.random.PRNGKey(0)
    kp, kt = jax.random.split(key)

    # NCHW-shaped inputs (as produced by a conv head): predict = sigmoid scores,
    # target = binary {0, 1} labels.
    shape = (2, 4, 16, 16)
    predict = jax.nn.sigmoid(jax.random.normal(kp, shape, dtype=jnp.float32))
    target = (jax.random.uniform(kt, shape) > 0.7).astype(jnp.float32)

    # f32 predict / f32 target (faithful to the PyTorch module's typical use).
    loss = jax.block_until_ready(focal_loss(predict, target))
    ref = focal_loss_ref(predict, target)
    assert jnp.allclose(loss, ref, rtol=1e-5, atol=1e-5), (loss, ref)

    # Narrow-dtype fast path (bf16 predict + int8 target): same semantics,
    # ~2.6x less HBM traffic; kernel upcasts in-register.
    p_bf16 = predict.astype(jnp.bfloat16)
    t_i8 = target.astype(jnp.int8)
    loss2 = jax.block_until_ready(focal_loss(p_bf16, t_i8))
    ref2 = focal_loss_ref(p_bf16.astype(jnp.float32), t_i8.astype(jnp.float32))
    assert jnp.allclose(loss2, ref2, rtol=1e-5, atol=1e-5), (loss2, ref2)

    print("KERNEL_OK")
</pallas_src>

<mosaic_0001>
module attributes {stable_mosaic.version = 11 : i64} {
  func.func @_focal_kernel(%arg0: i32, %arg1: memref<16x128xf32, #tpu.memory_space<vmem>>, %arg2: memref<16x128xf32, #tpu.memory_space<vmem>>, %arg3: memref<1x8x128xf32, #tpu.memory_space<vmem>>) attributes {dimension_semantics = [#tpu.dimension_semantics<parallel>], iteration_bounds = array<i64: 1>, scalar_prefetch = 0 : i64, scratch_operands = 0 : i64, tpu.core_type = #tpu.core_type<tc>, window_params = [{transform_indices = @transform_0, window_bounds = array<i64: 16, 128>}, {transform_indices = @transform_1, window_bounds = array<i64: 16, 128>}, {transform_indices = @transform_2, window_bounds = array<i64: 1, 8, 128>}]} {
    %c0 = arith.constant 0 : index
    %c0_0 = arith.constant 0 : index
    %0 = vector.load %arg1[%c0, %c0_0] : memref<16x128xf32, #tpu.memory_space<vmem>>, vector<16x128xf32>
    %c0_1 = arith.constant 0 : index
    %c0_2 = arith.constant 0 : index
    %1 = vector.load %arg2[%c0_1, %c0_2] : memref<16x128xf32, #tpu.memory_space<vmem>>, vector<16x128xf32>
    %cst = arith.constant 1.000000e-07 : f32
    %cst_3 = arith.constant 0.99999988 : f32
    %2 = vector.broadcast %cst : f32 to vector<16x128xf32>
    %3 = arith.maximumf %2, %0 : vector<16x128xf32>
    %4 = vector.broadcast %cst_3 : f32 to vector<16x128xf32>
    %5 = arith.minimumf %4, %3 : vector<16x128xf32>
    %cst_4 = arith.constant 1.000000e+00 : f32
    %6 = vector.broadcast %cst_4 : f32 to vector<16x128xf32>
    %7 = arith.cmpf oeq, %1, %6 : vector<16x128xf32>
    %cst_5 = arith.constant 0.000000e+00 : f32
    %8 = vector.broadcast %cst_5 : f32 to vector<16x128xf32>
    %9 = arith.cmpf oeq, %1, %8 : vector<16x128xf32>
    %cst_6 = arith.constant 1.000000e+00 : f32
    %10 = vector.broadcast %cst_6 : f32 to vector<16x128xf32>
    %11 = arith.subf %10, %5 : vector<16x128xf32>
    %12 = arith.select %7, %5, %11 : vector<16x128xi1>, vector<16x128xf32>
    %cst_7 = arith.constant 1.000000e+00 : f32
    %13 = vector.broadcast %cst_7 : f32 to vector<16x128xf32>
    %14 = arith.subf %13, %5 : vector<16x128xf32>
    %15 = arith.mulf %14, %14 : vector<16x128xf32>
    %cst_8 = arith.constant 2.500000e-01 : f32
    %16 = vector.broadcast %cst_8 : f32 to vector<16x128xf32>
    %17 = arith.mulf %16, %15 : vector<16x128xf32>
    %18 = arith.mulf %5, %5 : vector<16x128xf32>
    %cst_9 = arith.constant 7.500000e-01 : f32
    %19 = vector.broadcast %cst_9 : f32 to vector<16x128xf32>
    %20 = arith.mulf %19, %18 : vector<16x128xf32>
    %cst_10 = arith.constant 0.000000e+00 : f32
    %21 = vector.broadcast %cst_10 : f32 to vector<16x128xf32>
    %22 = arith.select %9, %20, %21 : vector<16x128xi1>, vector<16x128xf32>
    %23 = arith.select %7, %17, %22 : vector<16x128xi1>, vector<16x128xf32>
    %24 = tpu.iota {dimensions = array<i32: 0>} : vector<16x128xi32>
    %25 = tpu.iota {dimensions = array<i32: 1>} : vector<16x128xi32>
    %c16_i32 = arith.constant 16 : i32
    %26 = arith.muli %arg0, %c16_i32 : i32
    %27 = vector.broadcast %26 : i32 to vector<16x128xi32>
    %28 = arith.addi %27, %24 : vector<16x128xi32>
    %c128_i32 = arith.constant 128 : i32
    %29 = vector.broadcast %c128_i32 : i32 to vector<16x128xi32>
    %30 = arith.muli %28, %29 : vector<16x128xi32>
    %31 = arith.addi %30, %25 : vector<16x128xi32>
    %c2048_i32 = arith.constant 2048 : i32
    %32 = vector.broadcast %c2048_i32 : i32 to vector<16x128xi32>
    %33 = arith.cmpi slt, %31, %32 : vector<16x128xi32>
    %34 = math.log %12 : vector<16x128xf32>
    %35 = arith.mulf %23, %34 : vector<16x128xf32>
    %cst_11 = arith.constant 0.000000e+00 : f32
    %36 = vector.broadcast %cst_11 : f32 to vector<16x128xf32>
    %37 = arith.select %33, %35, %36 : vector<16x128xi1>, vector<16x128xf32>
    %38 = vector.shape_cast %37 : vector<16x128xf32> to vector<2x8x128xf32>
    %cst_12 = arith.constant dense<0.000000e+00> : vector<8x128xf32>
    %39 = vector.multi_reduction <add>, %38, %cst_12 [0] : vector<2x8x128xf32> to vector<8x128xf32>
    %c0_13 = arith.constant 0 : index
    %c0_14 = arith.constant 0 : index
    %c0_15 = arith.constant 0 : index
    %40 = vector.load %arg3[%c0_13, %c0_14, %c0_15] : memref<1x8x128xf32, #tpu.memory_space<vmem>>, vector<1x8x128xf32>
    %41 = vector.shape_cast %40 : vector<1x8x128xf32> to vector<8x128xf32>
    %42 = vector.shape_cast %39 : vector<8x128xf32> to vector<1x8x128xf32>
    tpu.vector_store %arg3[%c0_13, %c0_14, %c0_15], %42 {strides = array<i32>} : memref<1x8x128xf32, #tpu.memory_space<vmem>>, vector<1x8x128xf32>,
    return
  }
  func.func @transform_0(%arg0: i32) -> (i32, i32) {
    %c0_i32 = arith.constant 0 : i32
    %c0_i32_0 = arith.constant 0 : i32
    return %arg0, %c0_i32 : i32, i32
  }
  func.func @transform_1(%arg0: i32) -> (i32, i32) {
    %c0_i32 = arith.constant 0 : i32
    %c0_i32_0 = arith.constant 0 : i32
    return %arg0, %c0_i32 : i32, i32
  }
  func.func @transform_2(%arg0: i32) -> (i32, i32, i32) {
    %c0_i32 = arith.constant 0 : i32
    %c0_i32_0 = arith.constant 0 : i32
    %c0_i32_1 = arith.constant 0 : i32
    return %arg0, %c0_i32, %c0_i32_0 : i32, i32, i32
  }
}

</mosaic_0001>

<llo_original>
// kernel: tpu_custom_call.1
$region0: #{tpu_custom_call.1}
  #allocation0 [shape = 'u32[]', space=smem, size = 0x4, offset = 0x4, fixed_abs, tag = 'smem constant byte address 0x4 - core index']
  #allocation1 [shape = 'u32[144,128]{1,0:T(1,128)}', space=vmem, size = 0x12000, scoped, tag = 'internal scratch']
  %s0 = inlined_call_operand.hbm [shape: f32[16,128], index: 0, kind: input, shape index: {}]
  %s1 = inlined_call_operand.hbm [shape: f32[16,128], index: 1, kind: input, shape index: {}]
  %s2 = inlined_call_operand.hbm [shape: f32[1,8,128], index: 2, kind: output, shape index: {}]
  %s3 = sld [smem:[#allocation0]]
  $region26: #{tpu_custom_call.1} parent=0
    _
  %s5 = ssub.s32 1, %s3
  %s6 = scalar_select 0, %s5, %s3
  $region1: #{tpu_custom_call.1} parent=0
    #allocation2 [shape = 'u8[8192]{0}', space=vmem, size = 0x2000, scoped, tag = 'input window, operand 0, single buffered']
    #allocation3 [shape = 's32[1]{0}', space=sflag, size = 0x4, scoped, tag = 'scoped memory for tpu_custom_call.1']
    #allocation4 [shape = 's32[1]{0}', space=sflag, size = 0x4, scoped, tag = 'scoped memory for tpu_custom_call.1']
    #allocation5 [shape = 'u8[8192]{0}', space=vmem, size = 0x2000, scoped, tag = 'input window, operand 1, single buffered']
    #allocation6 [shape = 's32[1]{0}', space=sflag, size = 0x4, scoped, tag = 'scoped memory for tpu_custom_call.1']
    #allocation7 [shape = 'u8[4096]{0}', space=vmem, size = 0x1000, scoped, tag = 'output window, operand 0, single buffered']
    %7 = vsyncpa [#allocation3], 0
    %8 = vsyncpa [#allocation6], 0
    %9 = vsyncpa [#allocation4], 0
    // Predicated region
    $region2: #{tpu_custom_call.1} parent=1 // pred_check
      _
    $region3: #{tpu_custom_call.1} parent=1 // pred_check_branch
      %11 = sbr.rel (0) target = $region5
    $region4: #{tpu_custom_call.1} parent=1 // pred_region
      %s13 = ssub.s32 256, 256
      %14 = vsyncadd [#allocation3], %s13
      %s15 = sshll.u32 [#allocation2], 4
      %s16 = int_to_ptr.vmem [resolvable:$true] %s15
      %21 = dma.hbm_to_vmem [thread:$0]  %s0, 256, %s16, [#allocation3], 128, 128, 8
    $region5: #{tpu_custom_call.1} parent=1 // pred_fallthru
      _
    // Predicated region
    $region6: #{tpu_custom_call.1} parent=1 // pred_check
      _
    $region7: #{tpu_custom_call.1} parent=1 // pred_check_branch
      %23 = sbr.rel (0) target = $region9
    $region8: #{tpu_custom_call.1} parent=1 // pred_region
      %s25 = ssub.s32 256, 256
      %26 = vsyncadd [#allocation6], %s25
      %s27 = sshll.u32 [#allocation5], 4
      %s28 = int_to_ptr.vmem [resolvable:$true] %s27
      %33 = dma.hbm_to_vmem [thread:$0]  %s1, 256, %s28, [#allocation6], 128, 128, 8
    $region9: #{tpu_custom_call.1} parent=1 // pred_fallthru
      _
    // Predicated region
    $region10: #{tpu_custom_call.1} parent=1 // pred_check
      _
    $region11: #{tpu_custom_call.1} parent=1 // pred_check_branch
      %35 = sbr.rel (0) target = $region13
    $region12: #{tpu_custom_call.1} parent=1 // pred_region
      %36 = dma.done [#allocation3], 256
    $region13: #{tpu_custom_call.1} parent=1 // pred_fallthru
      _
    // Predicated region
    $region14: #{tpu_custom_call.1} parent=1 // pred_check
      _
    $region15: #{tpu_custom_call.1} parent=1 // pred_check_branch
      %38 = sbr.rel (0) target = $region17
    $region16: #{tpu_custom_call.1} parent=1 // pred_region
      %39 = dma.done [#allocation6], 256
    $region17: #{tpu_custom_call.1} parent=1 // pred_fallthru
      _
    %v40 = vld [vmem:[#allocation2] sm:$0xff]
    %v41 = vld [vmem:[#allocation2 + $0x8] sm:$0xff]
    %v42 = vld [vmem:[#allocation5] sm:$0xff]
    %v43 = vld [vmem:[#allocation5 + $0x8] sm:$0xff]
    %v44 = vmax.f32 %v40, 1e-07
    %v45 = vmax.f32 %v41, 1e-07
    %v46 = vmin.f32 %v44, 0.9999999
    %v47 = vmin.f32 %v45, 0.9999999
    %vm48 = vcmp.eq.f32.partialorder %v42, 1.0
    %vm49 = vcmp.eq.f32.partialorder %v43, 1.0
    %vm50 = vcmp.eq.f32.partialorder %v42, 0.0
    %vm51 = vcmp.eq.f32.partialorder %v43, 0.0
    %v52 = vsub.f32 1.0, %v46
    %v53 = vsub.f32 1.0, %v47
    %v54 = vsel %vm48, %v46, %v52
    %v55 = vsel %vm49, %v47, %v53
    %v56 = vmul.f32 %v52, %v52
    %v57 = vmul.f32 %v53, %v53
    %v58 = vmul.f32 %v56, 0.25
    %v59 = vmul.f32 %v57, 0.25
    %v60 = vmul.f32 %v46, %v46
    %v61 = vmul.f32 %v47, %v47
    %v62 = vmul.f32 %v60, 0.75
    %v63 = vmul.f32 %v61, 0.75
    %v64 = vsel %vm50, %v62, 0.0
    %v65 = vsel %vm51, %v63, 0.0
    %v66 = vsel %vm48, %v58, %v64
    %v67 = vsel %vm49, %v59, %v65
    %v68 = vlaneseq
    %v69 = vshrl.u32 %v68, 7
    %v70 = vadd.s32 %v69, 8
    %v71 = vlaneseq
    %v72 = vand.u32 %v71, 127
    %s73 = smul.u32 0, 16
    %v74 = vstv %s73
    %v75 = vadd.s32 %v74, %v69
    %v76 = vadd.s32 %v74, %v70
    %v77 = vmul.u32 %v75, 128
    %v78 = vmul.u32 %v76, 128
    %v79 = vadd.s32 %v77, %v72
    %v80 = vadd.s32 %v78, %v72
    %vm81 = vcmp.lt.s32.totalorder %v79, 2048
    %vm82 = vcmp.lt.s32.totalorder %v80, 2048
    %v83 = vlog2.pop %v54
    %v84 = vmul.f32 %v83, 0.6931472
    %v85 = vlog2.pop %v55
    %v86 = vmul.f32 %v85, 0.6931472
    %v87 = vmul.f32 %v66, %v84
    %v88 = vmul.f32 %v67, %v86
    %v89 = vsel %vm81, %v87, 0.0
    %v90 = vsel %vm82, %v88, 0.0
    %v91 = vadd.f32 %v89, %v90
    %92 = vst [vmem:[#allocation7] sm:$0xff] %v91
    // Predicated region
    $region18: #{tpu_custom_call.1} parent=1 // pred_check
      _
    $region19: #{tpu_custom_call.1} parent=1 // pred_check_branch
      %94 = sbr.rel (0) target = $region21
    $region20: #{tpu_custom_call.1} parent=1 // pred_region
      %s96 = ssub.s32 128, 128
      %97 = vsyncadd [#allocation4], %s96
      %s99 = sshll.u32 [#allocation7], 4
      %s100 = int_to_ptr.vmem [resolvable:$true] %s99
      %102 = dma.vmem_to_hbm [thread:$0]  %s100, 128, %s2, [#allocation4]
    $region21: #{tpu_custom_call.1} parent=1 // pred_fallthru
      _
    // Predicated region
    $region22: #{tpu_custom_call.1} parent=1 // pred_check
      _
    $region23: #{tpu_custom_call.1} parent=1 // pred_check_branch
      %104 = sbr.rel (0) target = $region25
    $region24: #{tpu_custom_call.1} parent=1 // pred_region
      %105 = dma.done [#allocation4], 128
    $region25: #{tpu_custom_call.1} parent=1 // pred_fallthru
      _
    %106 = vsyncpa [#allocation3], 1
    %107 = vsyncpa [#allocation6], 1
    %108 = vsyncpa [#allocation4], 1

</llo_original>
